<compile_context>
chip_gen: v6e
topology: v6e:2x2x1
jax: 0.10.0
libtpu: 0.0.40
codegen_flags: <defaults>
</compile_context>

<pallas_src>
import functools

import jax
import jax.numpy as jnp
from jax import lax
from jax.experimental import pallas as pl
from jax.experimental.pallas import tpu as pltpu


def _rmsnorm_kernel(x_ref, w_ref, o_ref, *, eps, inv_d):
    # x_ref: (row_tile, d_model) tile; w_ref: (1, d_model); o_ref: (row_tile, d_model)
    x = x_ref[...].astype(jnp.float32)
    w = w_ref[...].astype(jnp.float32)              # (1, d_model), broadcasts over rows
    ss = jnp.sum(x * x, axis=-1, keepdims=True)     # (row_tile, 1), XLU reduction
    rinv = lax.rsqrt(ss * inv_d + eps)              # EUP rsqrt: 1 / sqrt(mean + eps)
    o_ref[...] = (x * rinv * w).astype(o_ref.dtype)


def _vmem_capacity_bytes():
    """Physical per-TensorCore VMEM (64 MiB on v7x, 128 MiB on v5e/v6e)."""
    try:
        return int(pltpu.get_tpu_info().vmem_capacity_bytes)
    except Exception:
        return 64 << 20  # conservative fallback (v7x per-TC size)


def _sublane_multiple(dtype):
    """Packed sublane count for the second-minor dim: 8 f32, 16 bf16, 32 int8/fp8."""
    itemsize = jnp.dtype(dtype).itemsize
    return max(8, 32 // max(1, itemsize))


def _auto_row_tile(rows, d_model, in_itemsize, out_itemsize, vmem_budget_bytes,
                   sublane):
    """Largest sublane-multiple row tile whose double-buffered in+out fits budget."""
    bytes_per_row = 2 * d_model * (in_itemsize + out_itemsize)  # 2 bufs x (in + out)
    t = max(sublane, vmem_budget_bytes // bytes_per_row)
    t = (t // sublane) * sublane
    # Never larger than the sublane-padded problem size (single grid step then).
    rows_padded = ((rows + sublane - 1) // sublane) * sublane
    t = min(t, rows_padded)
    return int(max(sublane, t))


def rms_norm(x, w, *, eps=1e-5, row_tile=None, out_dtype=None,
             vmem_budget_bytes=None):
    """RMSNorm over the last axis of x ([batch, pos, d_model])."""
    batch, pos, d_model = x.shape
    rows = batch * pos
    if out_dtype is None:
        out_dtype = x.dtype

    in_itemsize = jnp.dtype(x.dtype).itemsize
    out_itemsize = jnp.dtype(out_dtype).itemsize
    w_itemsize = jnp.dtype(w.dtype).itemsize

    phys_vmem = _vmem_capacity_bytes()
    if vmem_budget_bytes is None:
        # Half of physical VMEM for the pipelined in+out buffers; leaves room for
        # Mosaic internal scratch and the weight tile on every generation.
        vmem_budget_bytes = phys_vmem // 2

    sublane = max(_sublane_multiple(x.dtype), _sublane_multiple(out_dtype))
    if row_tile is None:
        row_tile = _auto_row_tile(rows, d_model, in_itemsize, out_itemsize,
                                  vmem_budget_bytes, sublane)

    x2d = x.reshape(rows, d_model)
    w2d = w.reshape(1, d_model)

    # No wrapper pad / slice: Pallas masks the tail block's out-of-range rows.
    num_tiles = pl.cdiv(rows, row_tile)

    # Scoped-VMEM limit derived from the tiles actually in flight.
    tile_bytes = row_tile * d_model * (in_itemsize + out_itemsize)
    needed = 2 * tile_bytes + d_model * w_itemsize + (4 << 20)  # dbl-buffer + w + slack
    vmem_limit = int(min(max(needed, 32 << 20), (phys_vmem * 3) // 4))

    kernel = functools.partial(_rmsnorm_kernel, eps=float(eps),
                               inv_d=float(1.0 / d_model))

    out2d = pl.pallas_call(
        kernel,
        out_shape=jax.ShapeDtypeStruct((rows, d_model), out_dtype),
        grid_spec=pltpu.PrefetchScalarGridSpec(
            num_scalar_prefetch=0,
            grid=(num_tiles,),
            in_specs=[
                pl.BlockSpec((row_tile, d_model), lambda i: (i, 0)),
                pl.BlockSpec((1, d_model), lambda i: (0, 0)),
            ],
            out_specs=pl.BlockSpec((row_tile, d_model), lambda i: (i, 0)),
        ),
        compiler_params=pltpu.CompilerParams(
            dimension_semantics=("parallel",),
            vmem_limit_bytes=vmem_limit,
        ),
    )(x2d, w2d)

    return out2d.reshape(batch, pos, d_model)


if __name__ == "__main__":
    # Small shapes consistent with the module: [batch, pos, d_model]
    batch, pos, d_model = 2, 8, 32
    eps = 1e-5

    key = jax.random.PRNGKey(0)
    x = jax.random.normal(key, (batch, pos, d_model), dtype=jnp.float32)
    # Deterministic parameter init (module uses torch.ones(length)).
    w = jnp.ones((d_model,), dtype=jnp.float32)

    out = rms_norm(x, w, eps=eps, out_dtype=jnp.float32)
    out = jax.block_until_ready(out)

    # Reference check in plain JAX (matches the PyTorch forward).
    x32 = x.astype(jnp.float32)
    scale = jnp.sqrt(jnp.mean(x32 * x32, axis=-1, keepdims=True) + eps)
    ref = (x32 / scale * w).astype(jnp.float32)
    assert jnp.allclose(out, ref, atol=1e-5, rtol=1e-5), "mismatch vs reference"

    print("KERNEL_OK")
</pallas_src>

<mosaic_0001>
module attributes {stable_mosaic.version = 11 : i64} {
  func.func @_rmsnorm_kernel(%arg0: i32, %arg1: memref<16x32xf32, #tpu.memory_space<vmem>>, %arg2: memref<1x32xf32, #tpu.memory_space<vmem>>, %arg3: memref<16x32xf32, #tpu.memory_space<vmem>>) attributes {dimension_semantics = [#tpu.dimension_semantics<parallel>], iteration_bounds = array<i64: 1>, scalar_prefetch = 0 : i64, scratch_operands = 0 : i64, tpu.core_type = #tpu.core_type<tc>, window_params = [{transform_indices = @transform_0, window_bounds = array<i64: 16, 32>}, {pipeline_mode = #tpu.pipeline_mode<synchronous>, transform_indices = @transform_1, window_bounds = array<i64: 1, 32>}, {transform_indices = @transform_2, window_bounds = array<i64: 16, 32>}]} {
    %c0 = arith.constant 0 : index
    %c0_0 = arith.constant 0 : index
    %0 = vector.load %arg1[%c0, %c0_0] : memref<16x32xf32, #tpu.memory_space<vmem>>, vector<16x32xf32>
    %c0_1 = arith.constant 0 : index
    %c0_2 = arith.constant 0 : index
    %1 = vector.load %arg2[%c0_1, %c0_2] : memref<1x32xf32, #tpu.memory_space<vmem>>, vector<1x32xf32>
    %2 = arith.mulf %0, %0 : vector<16x32xf32>
    %cst = arith.constant dense<0.000000e+00> : vector<16xf32>
    %3 = vector.multi_reduction <add>, %2, %cst [1] : vector<16x32xf32> to vector<16xf32>
    %4 = vector.shape_cast %3 : vector<16xf32> to vector<16x1xf32>
    %cst_3 = arith.constant 3.125000e-02 : f32
    %5 = vector.broadcast %cst_3 : f32 to vector<16x1xf32>
    %6 = arith.mulf %4, %5 : vector<16x1xf32>
    %cst_4 = arith.constant 9.99999974E-6 : f32
    %7 = vector.broadcast %cst_4 : f32 to vector<16x1xf32>
    %8 = arith.addf %6, %7 : vector<16x1xf32>
    %9 = math.rsqrt %8 : vector<16x1xf32>
    %10 = vector.broadcast %9 : vector<16x1xf32> to vector<16x32xf32>
    %11 = arith.mulf %0, %10 : vector<16x32xf32>
    %12 = vector.broadcast %1 : vector<1x32xf32> to vector<16x32xf32>
    %13 = arith.mulf %11, %12 : vector<16x32xf32>
    %c0_5 = arith.constant 0 : index
    %c0_6 = arith.constant 0 : index
    %14 = vector.load %arg3[%c0_5, %c0_6] : memref<16x32xf32, #tpu.memory_space<vmem>>, vector<16x32xf32>
    tpu.vector_store %arg3[%c0_5, %c0_6], %13 {strides = array<i32>} : memref<16x32xf32, #tpu.memory_space<vmem>>, vector<16x32xf32>,
    return
  }
  func.func @transform_0(%arg0: i32) -> (i32, i32) {
    %c0_i32 = arith.constant 0 : i32
    %c0_i32_0 = arith.constant 0 : i32
    return %arg0, %c0_i32 : i32, i32
  }
  func.func @transform_1(%arg0: i32) -> (i32, i32) {
    %c0_i32 = arith.constant 0 : i32
    %c0_i32_0 = arith.constant 0 : i32
    %c0_i32_1 = arith.constant 0 : i32
    return %c0_i32, %c0_i32_0 : i32, i32
  }
  func.func @transform_2(%arg0: i32) -> (i32, i32) {
    %c0_i32 = arith.constant 0 : i32
    %c0_i32_0 = arith.constant 0 : i32
    return %arg0, %c0_i32 : i32, i32
  }
}

</mosaic_0001>

<llo_original>
// kernel: tpu_custom_call.1
$region0: #{tpu_custom_call.1}
  #allocation0 [shape = 'u32[]', space=smem, size = 0x4, offset = 0x4, fixed_abs, tag = 'smem constant byte address 0x4 - core index']
  #allocation1 [shape = 'u32[144,128]{1,0:T(1,128)}', space=vmem, size = 0x12000, scoped, tag = 'internal scratch']
  %s0 = inlined_call_operand.hbm [shape: f32[16,32], index: 0, kind: input, shape index: {}]
  %s1 = inlined_call_operand.vmem [shape: f32[1,32], index: 1, kind: input, shape index: {}]
  %s2 = inlined_call_operand.hbm [shape: f32[16,32], index: 2, kind: output, shape index: {}]
  %s3 = sld [smem:[#allocation0]]
  $region22: #{tpu_custom_call.1} parent=0
    _
  %s5 = ssub.s32 1, %s3
  %s6 = scalar_select 0, %s5, %s3
  $region1: #{tpu_custom_call.1} parent=0
    #allocation2 [shape = 'u8[8192]{0}', space=vmem, size = 0x2000, scoped, tag = 'input window, operand 0, single buffered']
    #allocation3 [shape = 's32[1]{0}', space=sflag, size = 0x4, scoped, tag = 'scoped memory for tpu_custom_call.1']
    #allocation4 [shape = 's32[1]{0}', space=sflag, size = 0x4, scoped, tag = 'scoped memory for tpu_custom_call.1']
    #allocation5 [shape = 'u8[8192]{0}', space=vmem, size = 0x2000, scoped, tag = 'output window, operand 0, single buffered']
    %7 = vsyncpa [#allocation3], 0
    %8 = vsyncpa [#allocation4], 0
    // Predicated region
    $region2: #{tpu_custom_call.1} parent=1 // pred_check
      _
    $region3: #{tpu_custom_call.1} parent=1 // pred_check_branch
      %10 = sbr.rel (0) target = $region5
    $region4: #{tpu_custom_call.1} parent=1 // pred_region
      %s12 = ssub.s32 256, 256
      %13 = vsyncadd [#allocation3], %s12
      %s14 = sshll.u32 [#allocation2], 4
      %s15 = int_to_ptr.vmem [resolvable:$true] %s14
      %20 = dma.hbm_to_vmem [thread:$0]  %s0, 256, %s15, [#allocation3], 128, 128, 8
    $region5: #{tpu_custom_call.1} parent=1 // pred_fallthru
      _
    // Predicated region
    $region6: #{tpu_custom_call.1} parent=1 // pred_check
      _
    $region7: #{tpu_custom_call.1} parent=1 // pred_check_branch
      %22 = sbr.rel (0) target = $region9
    $region8: #{tpu_custom_call.1} parent=1 // pred_region
      _
    $region9: #{tpu_custom_call.1} parent=1 // pred_fallthru
      _
    // Predicated region
    $region10: #{tpu_custom_call.1} parent=1 // pred_check
      _
    $region11: #{tpu_custom_call.1} parent=1 // pred_check_branch
      %24 = sbr.rel (0) target = $region13
    $region12: #{tpu_custom_call.1} parent=1 // pred_region
      %25 = dma.done [#allocation3], 256
    $region13: #{tpu_custom_call.1} parent=1 // pred_fallthru
      _
    %v26 = vld [vmem:[#allocation2] sm:$0xff]
    %v27 = vld [vmem:[#allocation2 + $0x8] sm:$0xff]
    %v28 = vld [vmem:[%s1] sm:$0x1]
    %v29 = vmul.f32 %v26, %v26
    %v30 = vmul.f32 %v27, %v27
    %vm31 = vcmask 261120
    %v32 = vsel %vm31, %v29, 0.0
    %33 = vadd.xlane.f32.xlu0 %v32
    %v34 = vpop.xlane.xlu0 %33
    %v35 = vsel %vm31, %v30, 0.0
    %36 = vadd.xlane.f32.xlu0 %v35
    %v37 = vpop.xlane.xlu0 %36
    %v38 = vmul.f32 %v34, 0.03125
    %v39 = vmul.f32 %v37, 0.03125
    %v40 = vadd.f32 %v38, 1e-05
    %v41 = vadd.f32 %v39, 1e-05
    %v42 = vrsqrt.pop %v40
    %v43 = vrsqrt.pop %v41
    %v44 = vmul.f32 %v26, %v42
    %v45 = vmul.f32 %v27, %v43
    %v47 = vlaneseq
    %v48 = vshrl.u32 %v47, 7
    %v49 = vsub.s32 0, %v48
    %v50 = vrot.slane %v28, %v49
    %v52 = vmul.f32 %v44, %v50
    %v53 = vmul.f32 %v45, %v50
    %54 = vst.msk [vmem:[#allocation5] sm:$0xff] %vm31, %v52
    %55 = vst.msk [vmem:[#allocation5 + $0x8] sm:$0xff] %vm31, %v53
    // Predicated region
    $region14: #{tpu_custom_call.1} parent=1 // pred_check
      _
    $region15: #{tpu_custom_call.1} parent=1 // pred_check_branch
      %57 = sbr.rel (0) target = $region17
    $region16: #{tpu_custom_call.1} parent=1 // pred_region
      %s59 = ssub.s32 256, 256
      %60 = vsyncadd [#allocation4], %s59
      %s61 = sshll.u32 [#allocation5], 4
      %s62 = int_to_ptr.vmem [resolvable:$true] %s61
      %67 = dma.vmem_to_hbm [thread:$0]  %s62, 256, %s2, [#allocation4], 128, 128, 8
    $region17: #{tpu_custom_call.1} parent=1 // pred_fallthru
      _
    // Predicated region
    $region18: #{tpu_custom_call.1} parent=1 // pred_check
      _
    $region19: #{tpu_custom_call.1} parent=1 // pred_check_branch
      %69 = sbr.rel (0) target = $region21
    $region20: #{tpu_custom_call.1} parent=1 // pred_region
      %70 = dma.done [#allocation4], 256
    $region21: #{tpu_custom_call.1} parent=1 // pred_fallthru
      _
    %71 = vsyncpa [#allocation3], 1
    %72 = vsyncpa [#allocation4], 1

</llo_original>
